<compile_context>
chip_gen: v6e
topology: v6e:2x2x1
jax: 0.10.0
libtpu: 0.0.40
codegen_flags: <defaults>
</compile_context>

<pallas_src>
import jax
import jax.numpy as jnp
from jax import lax
from jax.experimental import pallas as pl
from jax.experimental.pallas import tpu as pltpu


def _precode_kernel(w_ref, x_ref, o_ref):
    # w_ref: (1, GP, GL)      block-diagonal real-stacked precoder for this tx
    # x_ref: (bg, 1, GL, nt)  bg batch groups of stacked [real ; imag] layers
    # o_ref: (bg, 1, GP, nt)  bg batch groups of stacked [real ; imag] ports
    w = w_ref[0]
    for b in range(x_ref.shape[0]):           # static unroll over folded groups
        o_ref[b, 0] = jnp.dot(w, x_ref[b, 0],
                              preferred_element_type=jnp.float32)


def _round_up(v, m):
    return (v + m - 1) // m * m


def _pick_batch_group(batch, two_min_dim):
    """Smallest divisor g of `batch` with g * two_min_dim >= 8 (else batch)."""
    if two_min_dim >= 8:
        return 1
    for g in range(1, batch + 1):
        if batch % g == 0 and g * two_min_dim >= 8:
            return g
    return batch  # correct but sublane-padded fallback (tiny L, P, B)


def pusch_precode(x, w, *, max_lane_tile=32768,
                  vmem_budget_bytes=12 * 1024 * 1024):
    """x: complex64 [B, T, L, S, F]; w: complex64 [T, P, L].

    Returns complex64 [B, T, P, S, F]:
        out[b,t,p,s,f] = sum_l w[t,p,l] * x[b,t,l,s,f]
    """
    B, T, L, S, F = x.shape
    Tw, P, Lw = w.shape
    assert T == Tw and L == Lw
    N = S * F

    g = _pick_batch_group(B, 2 * min(L, P))
    GL = g * 2 * L                      # stacked contraction dim (sublanes in)
    GP = g * 2 * P                      # stacked output dim (sublanes out)
    BG = B // g

    # ---- lane tile: big, multiple of 128 when possible; cdiv grid for edges.
    if N % 128 == 0:
        nt = min(max_lane_tile, N)
    elif N > max_lane_tile:
        nt = max_lane_tile              # multiple of 128; partial edge block
    else:
        nt = N                          # full-extent lane block
    rows_pad = _round_up(GL, 8) + _round_up(GP, 8)
    if nt % 128 == 0:
        nt_fit = max(128, (vmem_budget_bytes // (2 * rows_pad * 4)) // 128 * 128)
        nt = min(nt, nt_fit)
    bytes_per_group = rows_pad * nt * 4              # in + out (padded) / group
    bg = int(max(1, min(BG, vmem_budget_bytes // (2 * bytes_per_group))))
    grid_b = pl.cdiv(BG, bg)
    grid_n = pl.cdiv(N, nt)

    # ---- real-stacked precoder:  Wstack[t] = [[Wr, -Wi], [Wi, Wr]]  (2P, 2L)
    wr = jnp.real(w).astype(jnp.float32)
    wi = jnp.imag(w).astype(jnp.float32)
    top = jnp.concatenate([wr, -wi], axis=2)          # (T, P, 2L)
    bot = jnp.concatenate([wi, wr], axis=2)           # (T, P, 2L)
    wstack = jnp.concatenate([top, bot], axis=1)      # (T, 2P, 2L)
    # block-diagonal over the minimal batch group: Wg[t] = kron(I_g, Wstack[t])
    eye_g = jnp.eye(g, dtype=jnp.float32)
    wg = jnp.einsum("ab,tij->taibj", eye_g, wstack).reshape(T, GP, GL)

    # ---- stacked input planes, batch-major:  (B/g, T, g*2L, N)
    xr = jnp.real(x).astype(jnp.float32).reshape(B, T, L, N)
    xi = jnp.imag(x).astype(jnp.float32).reshape(B, T, L, N)
    xs = jnp.concatenate([xr, xi], axis=2)            # (B, T, 2L, N)
    xg = (xs.reshape(BG, g, T, 2 * L, N)
            .transpose(0, 2, 1, 3, 4)
            .reshape(BG, T, GL, N))

    w_spec = pl.BlockSpec((1, GP, GL), lambda t, b, n: (t, 0, 0))
    x_spec = pl.BlockSpec((bg, 1, GL, nt), lambda t, b, n: (b, t, 0, n))
    o_spec = pl.BlockSpec((bg, 1, GP, nt), lambda t, b, n: (b, t, 0, n))

    flops = 2 * BG * T * GP * GL * N
    bytes_accessed = 4 * (BG * T * GL * N + BG * T * GP * N + T * GP * GL)
    vmem_limit = int(min(64 * 1024 * 1024,
                         max(32 * 1024 * 1024,
                             4 * bg * bytes_per_group + (2 << 20))))

    out = pl.pallas_call(
        _precode_kernel,
        out_shape=jax.ShapeDtypeStruct((BG, T, GP, N), jnp.float32),
        grid_spec=pltpu.PrefetchScalarGridSpec(
            num_scalar_prefetch=0,
            grid=(T, grid_b, grid_n),
            in_specs=[w_spec, x_spec],
            out_specs=o_spec,
        ),
        compiler_params=pltpu.CompilerParams(
            dimension_semantics=("parallel", "parallel", "parallel"),
            vmem_limit_bytes=vmem_limit,
        ),
        cost_estimate=pl.CostEstimate(
            flops=flops, transcendentals=0, bytes_accessed=bytes_accessed),
    )(wg, xg)

    # ---- unstack: per group member, rows [0:P) real, [P:2P) imaginary.
    og = (out.reshape(BG, T, g, 2 * P, N)
             .transpose(0, 2, 1, 3, 4)
             .reshape(B, T, 2 * P, N))
    out_c = lax.complex(og[:, :, :P, :], og[:, :, P:, :]).astype(jnp.complex64)
    return out_c.reshape(B, T, P, S, F)


def _reference(x, w):
    # out[b,t,p,s,f] = sum_l w[t,p,l] * x[b,t,l,s,f]
    return jnp.einsum("tpl,btlsf->btpsf", w, x)


if __name__ == "__main__":
    # Small shapes consistent with the module's forward.
    B = 2                 # batch_size
    T = 2                 # num_tx
    L = 2                 # num_layers
    P = 4                 # num_antenna_ports
    S = 8                 # num_symbols_per_slot
    F = 16                # num_subcarriers  (S*F = 128 -> one lane tile)

    key = jax.random.PRNGKey(0)
    k1, k2, k3, k4 = jax.random.split(key, 4)

    # Deterministic synthetic precoding matrices [T, P, L] (complex64).
    w = (jax.random.normal(k1, (T, P, L), dtype=jnp.float32)
         + 1j * jax.random.normal(k2, (T, P, L), dtype=jnp.float32)
         ).astype(jnp.complex64) / jnp.sqrt(jnp.float32(P))

    # Deterministic input resource grid [B, T, L, S, F] (complex64).
    x = (jax.random.normal(k3, (B, T, L, S, F), dtype=jnp.float32)
         + 1j * jax.random.normal(k4, (B, T, L, S, F), dtype=jnp.float32)
         ).astype(jnp.complex64)

    out = jax.block_until_ready(pusch_precode(x, w))

    ref = _reference(x, w)
    assert out.shape == (B, T, P, S, F)
    assert jnp.allclose(out, ref, atol=1e-4, rtol=1e-4)

    print("KERNEL_OK")
</pallas_src>

<mosaic_0001>
module attributes {stable_mosaic.version = 11 : i64} {
  func.func @_precode_kernel(%arg0: i32, %arg1: i32, %arg2: i32, %arg3: memref<1x16x8xf32, #tpu.memory_space<vmem>>, %arg4: memref<1x1x8x128xf32, #tpu.memory_space<vmem>>, %arg5: memref<1x1x16x128xf32, #tpu.memory_space<vmem>>) attributes {dimension_semantics = [#tpu.dimension_semantics<parallel>, #tpu.dimension_semantics<parallel>, #tpu.dimension_semantics<parallel>], iteration_bounds = array<i64: 2, 1, 1>, scalar_prefetch = 0 : i64, scratch_operands = 0 : i64, tpu.core_type = #tpu.core_type<tc>, window_params = [{transform_indices = @transform_0, window_bounds = array<i64: 1, 16, 8>}, {transform_indices = @transform_1, window_bounds = array<i64: 1, 1, 8, 128>}, {transform_indices = @transform_2, window_bounds = array<i64: 1, 1, 16, 128>}]} {
    %c0 = arith.constant 0 : index
    %c0_0 = arith.constant 0 : index
    %c0_1 = arith.constant 0 : index
    %0 = vector.load %arg3[%c0, %c0_0, %c0_1] : memref<1x16x8xf32, #tpu.memory_space<vmem>>, vector<1x16x8xf32>
    %1 = vector.shape_cast %0 : vector<1x16x8xf32> to vector<16x8xf32>
    %c0_2 = arith.constant 0 : index
    %c0_3 = arith.constant 0 : index
    %c0_4 = arith.constant 0 : index
    %c0_5 = arith.constant 0 : index
    %2 = vector.load %arg4[%c0_2, %c0_3, %c0_4, %c0_5] : memref<1x1x8x128xf32, #tpu.memory_space<vmem>>, vector<1x1x8x128xf32>
    %3 = vector.shape_cast %2 : vector<1x1x8x128xf32> to vector<8x128xf32>
    %cst = arith.constant dense<0.000000e+00> : vector<16x128xf32>
    %4 = tpu.matmul %1, %3, %cst {dimension_numbers = #tpu.dot_dimension_numbers<[1], [0], [0], [1], [0, 0, 1, 1], [], []>} : vector<16x8xf32>, vector<8x128xf32>, vector<16x128xf32> -> vector<16x128xf32>
    %c0_6 = arith.constant 0 : index
    %c0_7 = arith.constant 0 : index
    %c0_8 = arith.constant 0 : index
    %c0_9 = arith.constant 0 : index
    %5 = vector.load %arg5[%c0_6, %c0_7, %c0_8, %c0_9] : memref<1x1x16x128xf32, #tpu.memory_space<vmem>>, vector<1x1x16x128xf32>
    %6 = vector.shape_cast %5 : vector<1x1x16x128xf32> to vector<16x128xf32>
    %7 = vector.shape_cast %4 : vector<16x128xf32> to vector<1x1x16x128xf32>
    tpu.vector_store %arg5[%c0_6, %c0_7, %c0_8, %c0_9], %7 {strides = array<i32>} : memref<1x1x16x128xf32, #tpu.memory_space<vmem>>, vector<1x1x16x128xf32>,
    return
  }
  func.func @transform_0(%arg0: i32, %arg1: i32, %arg2: i32) -> (i32, i32, i32) {
    %c0_i32 = arith.constant 0 : i32
    %c0_i32_0 = arith.constant 0 : i32
    %c0_i32_1 = arith.constant 0 : i32
    return %arg0, %c0_i32, %c0_i32_0 : i32, i32, i32
  }
  func.func @transform_1(%arg0: i32, %arg1: i32, %arg2: i32) -> (i32, i32, i32, i32) {
    %c0_i32 = arith.constant 0 : i32
    %c0_i32_0 = arith.constant 0 : i32
    return %arg1, %arg0, %c0_i32, %arg2 : i32, i32, i32, i32
  }
  func.func @transform_2(%arg0: i32, %arg1: i32, %arg2: i32) -> (i32, i32, i32, i32) {
    %c0_i32 = arith.constant 0 : i32
    %c0_i32_0 = arith.constant 0 : i32
    return %arg1, %arg0, %c0_i32, %arg2 : i32, i32, i32, i32
  }
}

</mosaic_0001>

<llo_original>
// kernel: tpu_custom_call.1
$region0: #{tpu_custom_call.1}
  #allocation0 [shape = 'u32[]', space=smem, size = 0x4, offset = 0x4, fixed_abs, tag = 'smem constant byte address 0x4 - core index']
  #allocation1 [shape = 'u32[144,128]{1,0:T(1,128)}', space=vmem, size = 0x12000, scoped, tag = 'internal scratch']
  %s0 = inlined_call_operand.vmem [shape: f32[2,16,8], index: 0, kind: input, shape index: {}]
  %s1 = inlined_call_operand.vmem [shape: f32[1,2,8,128], index: 1, kind: input, shape index: {}]
  %s2 = inlined_call_operand.hbm [shape: f32[1,2,16,128], index: 2, kind: output, shape index: {}]
  %s3 = sld [smem:[#allocation0]]
  $region41: #{tpu_custom_call.1} parent=0
    _
  %s5 = ssub.s32 1, %s3
  %s6 = scalar_select 0, %s5, %s3
  $region1: #{tpu_custom_call.1} parent=0
    #allocation2 [shape = 'u8[16384]{0}', space=vmem, size = 0x4000, scoped, tag = 'output window, operand 0']
    #allocation3 [shape = 's32[2]{0}', space=sflag, size = 0x8, scoped, tag = 'scoped memory for tpu_custom_call.1']
    %7 = vsyncpa [#allocation3], 0
    %s8 = scalar_lea.sflag [#allocation3], 1
    %9 = vsyncpa %s8, 0
    loop: start=0, step=1, limit=4
    $region2: #{tpu_custom_call.1} parent=1 // loop_pre_header
      _
    $region3: #{tpu_custom_call.1} parent=1 // loop_header
      %s11 = sphi 0, %s15
      %p12 = scmp.ge.s32.totalorder %s11, 4
      %s18 = sphi 0, %s37
      %s19 = sphi 0, %s33
      %s20 = sphi 0, %s29
      %s21 = sphi 0, %s18
      %s22 = sphi 0, %s19
      %s23 = sphi 0, %s20
      %s24 = sphi 0, %s21
      %s25 = sphi 0, %s22
      %s26 = sphi 0, %s23
      %s40 = sphi 0, %s42
      %s43 = sphi 0, %s40
      %s44 = sphi 0, %s43
      %s60 = sphi 0, %s44
      %s70 = sphi 0, %s72
      %s73 = sphi 0, %s70
      %s74 = sphi 0, %s73
      %s90 = sphi 0, %s74
      %s100 = sphi 0, %s102
      %s103 = sphi 0, %s100
      %s104 = sphi 0, %s103
      %s120 = sphi 0, %s104
    $region4: #{tpu_custom_call.1} parent=1 // loop_header_branch
      %14 = sbr.rel (%p12) target = $region8
    $region5: #{tpu_custom_call.1} parent=1 // loop_body
      %s16 = ssub.s32 %s11, 1
      %s17 = ssub.s32 %s11, 2
      %s27 = sadd.s32 1, %s20
      %p28 = scmp.ge.s32.totalorder %s27, 1
      %s29 = scalar_select %p28, 0, %s27
      %s30 = sadd.s32 1, %s19
      %s31 = scalar_select %p28, %s30, %s19
      %p32 = scmp.ge.s32.totalorder %s31, 1
      %s33 = scalar_select %p32, 0, %s31
      %s34 = sadd.s32 1, %s18
      %s35 = scalar_select %p32, %s34, %s18
      %p36 = scmp.ge.s32.totalorder %s35, 2
      %s37 = scalar_select %p36, 0, %s35
      %s38 = ssub.s32 %s18, %s37
      %p39 = scmp.eq.s32.totalorder %s38, 0
      %s41 = sadd.s32 %s40, 1
      %s42 = scalar_select %p39, %s40, %s41
      %p45 = pneg %p39
      %p46 = scmp.eq.s32.totalorder %s11, 1
      %p47 = por %p45, %p46
      %p48 = scmp.ne.s32.totalorder %s40, %s43
      %p49 = scmp.eq.s32.totalorder %s11, 0
      %p50 = por %p48, %p49
      %p51 = scmp.ne.s32.totalorder %s40, %s43
      %p52 = scmp.eq.s32.totalorder %s16, 1
      %p53 = por %p51, %p52
      %p54 = scmp.ne.s32.totalorder %s43, %s44
      %p55 = scmp.eq.s32.totalorder %s16, 0
      %p56 = por %p54, %p55
      %p57 = scmp.ne.s32.totalorder %s43, %s44
      %p58 = scmp.eq.s32.totalorder %s17, 1
      %p59 = por %p57, %p58
      %p61 = scmp.ne.s32.totalorder %s44, %s60
      %p62 = scmp.eq.s32.totalorder %s17, 0
      %p63 = por %p61, %p62
      %s64 = ssub.s32 %s19, %s33
      %s65 = ssub.s32 %s18, %s37
      %s66 = sor.u32 %s64, %s65
      %s67 = ssub.s32 %s20, %s29
      %s68 = sor.u32 %s66, %s67
      %p69 = scmp.eq.s32.totalorder %s68, 0
      %s71 = sadd.s32 %s70, 1
      %s72 = scalar_select %p69, %s70, %s71
      %p75 = pneg %p69
      %p76 = scmp.eq.s32.totalorder %s11, 1
      %p77 = por %p75, %p76
      %p78 = scmp.ne.s32.totalorder %s70, %s73
      %p79 = scmp.eq.s32.totalorder %s11, 0
      %p80 = por %p78, %p79
      %p81 = scmp.ne.s32.totalorder %s70, %s73
      %p82 = scmp.eq.s32.totalorder %s16, 1
      %p83 = por %p81, %p82
      %p84 = scmp.ne.s32.totalorder %s73, %s74
      %p85 = scmp.eq.s32.totalorder %s16, 0
      %p86 = por %p84, %p85
      %p87 = scmp.ne.s32.totalorder %s73, %s74
      %p88 = scmp.eq.s32.totalorder %s17, 1
      %p89 = por %p87, %p88
      %p91 = scmp.ne.s32.totalorder %s74, %s90
      %p92 = scmp.eq.s32.totalorder %s17, 0
      %p93 = por %p91, %p92
      %s94 = ssub.s32 %s19, %s33
      %s95 = ssub.s32 %s18, %s37
      %s96 = sor.u32 %s94, %s95
      %s97 = ssub.s32 %s20, %s29
      %s98 = sor.u32 %s96, %s97
      %p99 = scmp.eq.s32.totalorder %s98, 0
      %s101 = sadd.s32 %s100, 1
      %s102 = scalar_select %p99, %s100, %s101
      %p105 = pneg %p99
      %p106 = scmp.eq.s32.totalorder %s11, 1
      %p107 = por %p105, %p106
      %p108 = scmp.ne.s32.totalorder %s100, %s103
      %p109 = scmp.eq.s32.totalorder %s11, 0
      %p110 = por %p108, %p109
      %p111 = scmp.ne.s32.totalorder %s100, %s103
      %p112 = scmp.eq.s32.totalorder %s16, 1
      %p113 = por %p111, %p112
      %p114 = scmp.ne.s32.totalorder %s103, %s104
      %p115 = scmp.eq.s32.totalorder %s16, 0
      %p116 = por %p114, %p115
      %p117 = scmp.ne.s32.totalorder %s103, %s104
      %p118 = scmp.eq.s32.totalorder %s17, 1
      %p119 = por %p117, %p118
      %p121 = scmp.ne.s32.totalorder %s104, %s120
      %p122 = scmp.eq.s32.totalorder %s17, 0
      %p123 = por %p121, %p122
      %p124 = scmp.le.s32.totalorder 1, %s11
      %p125 = scmp.lt.s32.totalorder %s11, 3
      %p126 = pnand %p124, %p125
      %p127 = pneg %p126
      // Predicated region
      $region9: #{tpu_custom_call.1} parent=5 // pred_check
        _
      $region10: #{tpu_custom_call.1} parent=5 // pred_check_branch
        %129 = sbr.rel (%p126) target = $region12
      $region11: #{tpu_custom_call.1} parent=5 // pred_region
        %s130 = ssub.s32 %s11, 1
      $region12: #{tpu_custom_call.1} parent=5 // pred_fallthru
        _
      %p131 = scmp.lt.s32.totalorder %s11, 2
      // Predicated region
      $region13: #{tpu_custom_call.1} parent=5 // pred_check
        %p132 = pneg %p131
      $region14: #{tpu_custom_call.1} parent=5 // pred_check_branch
        %134 = sbr.rel (%p132) target = $region16
      $region15: #{tpu_custom_call.1} parent=5 // pred_region
        // Predicated region
        $region17: #{tpu_custom_call.1} parent=15 // pred_check
          %p135 = pneg %p50
        $region18: #{tpu_custom_call.1} parent=15 // pred_check_branch
          %137 = sbr.rel (%p135) target = $region20
        $region19: #{tpu_custom_call.1} parent=15 // pred_region
          %p138 = scmp.lt.s32.totalorder %s18, 1
          %s139 = scalar_select %p138, %s18, 1
          %s140 = smul.addr %s139, 2
          %s141 = smul.addr %s140, 8
          %s142 = scalar_lea.vmem %s0, %s141
        $region20: #{tpu_custom_call.1} parent=15 // pred_fallthru
          _
        // Predicated region
        $region21: #{tpu_custom_call.1} parent=15 // pred_check
          %p143 = pneg %p80
        $region22: #{tpu_custom_call.1} parent=15 // pred_check_branch
          %145 = sbr.rel (%p143) target = $region24
        $region23: #{tpu_custom_call.1} parent=15 // pred_region
          %p146 = scmp.lt.s32.totalorder %s19, 0
          %s147 = scalar_select %p146, %s19, 0
          %p148 = scmp.lt.s32.totalorder %s18, 1
          %s149 = scalar_select %p148, %s18, 1
          %p150 = scmp.lt.s32.totalorder %s20, 0
          %s151 = scalar_select %p150, %s20, 0
          %s152 = sadd.s32 %s151, %s149
          %s153 = smul.addr %s147, 2
          %s154 = sadd.s32 %s152, %s153
          %s155 = smul.addr %s154, 8
          %s156 = scalar_lea.vmem %s1, %s155
        $region24: #{tpu_custom_call.1} parent=15 // pred_fallthru
          _
      $region16: #{tpu_custom_call.1} parent=5 // pred_fallthru
        _
      %p157 = scmp.le.s32.totalorder 1, %s11
      %p158 = scmp.lt.s32.totalorder %s11, 3
      %p159 = pnand %p157, %p158
      %p160 = pneg %p159
      // Predicated region
      $region25: #{tpu_custom_call.1} parent=5 // pred_check
        _
      $region26: #{tpu_custom_call.1} parent=5 // pred_check_branch
        %162 = sbr.rel (%p159) target = $region28
      $region27: #{tpu_custom_call.1} parent=5 // pred_region
        %s163 = ssub.s32 %s11, 1
        %p164 = scmp.lt.s32.totalorder %s21, 1
        %s165 = scalar_select %p164, %s21, 1
        %s166 = smul.addr %s165, 2
        %s167 = smul.addr %s166, 8
        %s168 = scalar_lea.vmem %s0, %s167
        %p169 = pneg %p56
        %p170 = pneg %p53
        %p171 = scmp.lt.s32.totalorder %s22, 0
        %s172 = scalar_select %p171, %s22, 0
        %p173 = scmp.lt.s32.totalorder %s21, 1
        %s174 = scalar_select %p173, %s21, 1
        %p175 = scmp.lt.s32.totalorder %s23, 0
        %s176 = scalar_select %p175, %s23, 0
        %s177 = sadd.s32 %s176, %s174
        %s178 = smul.addr %s172, 2
        %s179 = sadd.s32 %s177, %s178
        %s180 = smul.addr %s179, 8
        %s181 = scalar_lea.vmem %s1, %s180
        %p182 = pneg %p86
        %p183 = pneg %p83
        %p184 = pneg %p116
        %p185 = pneg %p113
        %s186 = sand.u32 %s103, 1
        %s187 = scalar_lea.sflag [#allocation3], %s186
        %s188 = sand.u32 %s103, 1
        %s189 = smul.addr %s188, 16
        %s190 = scalar_lea.vmem [#allocation2], %s189
        %p191 = scmp.lt.s32.totalorder %s21, 1
        %s192 = scalar_select %p191, %s21, 1
        %s193 = smul.addr %s192, 2
        %s194 = smul.addr %s193, 8
        %s195 = scalar_lea.vmem %s0, %s194
        %p196 = scmp.lt.s32.totalorder %s22, 0
        %s197 = scalar_select %p196, %s22, 0
        %p198 = scmp.lt.s32.totalorder %s21, 1
        %s199 = scalar_select %p198, %s21, 1
        %p200 = scmp.lt.s32.totalorder %s23, 0
        %s201 = scalar_select %p200, %s23, 0
        %s202 = sadd.s32 %s201, %s199
        %s203 = smul.addr %s197, 2
        %s204 = sadd.s32 %s202, %s203
        %s205 = smul.addr %s204, 8
        %s206 = scalar_lea.vmem %s1, %s205
        %v207 = vld [vmem:[%s195] sm:$0xff]
        %v208 = vld [vmem:[%s195 + $0x8] sm:$0xff]
        %v209 = vld [vmem:[%s206] sm:$0xff]
        %vm210 = vcmask 64512
        %v212 = vsel %vm210, %v207, 0
        %v215 = vsel %vm210, %v208, 0
        %217 = vmatprep.subr.mxu0 0.0
        %218 = vmatpush1.msra.mxu0 0.0
        %219 = vmatprep.subr.mxu0 0.0
        %220 = vmatpush1.msra.mxu0 0.0
        %221 = vmatprep.subr.mxu0 0.0
        %222 = vmatpush1.msra.mxu0 0.0
        %223 = vmatprep.subr.mxu0 0.0
        %224 = vmatpush1.msra.mxu0 0.0
        %225 = vmatprep.subr.mxu0 0.0
        %226 = vmatpush1.msra.mxu0 0.0
        %227 = vmatprep.subr.mxu0 0.0
        %228 = vmatpush1.msra.mxu0 0.0
        %229 = vmatprep.subr.mxu0 0.0
        %230 = vmatpush1.msra.mxu0 0.0
        %231 = vmatprep.subr.mxu0 0.0
        %232 = vmatpush1.msra.mxu0 0.0
        %233 = vmatprep.subr.mxu0 0.0
        %234 = vmatpush1.msra.mxu0 0.0
        %235 = vmatprep.subr.mxu0 0.0
        %236 = vmatpush1.msra.mxu0 0.0
        %237 = vmatprep.subr.mxu0 0.0
        %238 = vmatpush1.msra.mxu0 0.0
        %239 = vmatprep.subr.mxu0 0.0
        %240 = vmatpush1.msra.mxu0 0.0
        %241 = vmatprep.subr.mxu0 0.0
        %242 = vmatpush1.msra.mxu0 0.0
        %243 = vmatprep.subr.mxu0 0.0
        %244 = vmatpush1.msra.mxu0 0.0
        %245 = vmatprep.subr.mxu0 0.0
        %246 = vmatpush1.msra.mxu0 0.0
        %247 = vmatprep.subr.mxu0 0.0
        %248 = vmatpush1.msra.mxu0 %v209
        %249 = vmatprep.subr.mxu0 0.0
        %250 = vmatpush2.msra.mxu0 0.0
        %251 = vmatprep.subr.mxu0 0.0
        %252 = vmatpush2.msra.mxu0 0.0
        %253 = vmatprep.subr.mxu0 0.0
        %254 = vmatpush2.msra.mxu0 0.0
        %255 = vmatprep.subr.mxu0 0.0
        %256 = vmatpush2.msra.mxu0 0.0
        %257 = vmatprep.subr.mxu0 0.0
        %258 = vmatpush2.msra.mxu0 0.0
        %259 = vmatprep.subr.mxu0 0.0
        %260 = vmatpush2.msra.mxu0 0.0
        %261 = vmatprep.subr.mxu0 0.0
        %262 = vmatpush2.msra.mxu0 0.0
        %263 = vmatprep.subr.mxu0 0.0
        %264 = vmatpush2.msra.mxu0 0.0
        %265 = vmatprep.subr.mxu0 0.0
        %266 = vmatpush2.msra.mxu0 0.0
        %267 = vmatprep.subr.mxu0 0.0
        %268 = vmatpush2.msra.mxu0 0.0
        %269 = vmatprep.subr.mxu0 0.0
        %270 = vmatpush2.msra.mxu0 0.0
        %271 = vmatprep.subr.mxu0 0.0
        %272 = vmatpush2.msra.mxu0 0.0
        %273 = vmatprep.subr.mxu0 0.0
        %274 = vmatpush2.msra.mxu0 0.0
        %275 = vmatprep.subr.mxu0 0.0
        %276 = vmatpush2.msra.mxu0 0.0
        %277 = vmatprep.subr.mxu0 0.0
        %278 = vmatpush2.msra.mxu0 0.0
        %279 = vmatprep.subr.mxu0 0.0
        %280 = vmatpush2.msra.mxu0 0.0
        %281 = vmatprep.mubr.f32.mxu0 0.0
        %282 = vmatmul.mubr.f32.gmra.mxu0 %v212
        %v283 = vpop.f32.mrf.mxu0
        %v284 = vadd.f32 0.0, %v283
        %v285 = vpop.f32.mrf.mxu0
        %286 = vmatprep.mubr.f32.mxu0 0.0
        %287 = vmatmul.mubr.f32.gmra.mxu0 %v215
        %v288 = vpop.f32.mrf.mxu0
        %v289 = vadd.f32 0.0, %v288
        %v290 = vpop.f32.mrf.mxu0
        %291 = vdwg.mxu0
        %292 = vst [vmem:[%s190] sm:$0xff] %v284
        %293 = vst [vmem:[%s190 + $0x8] sm:$0xff] %v289
        %s294 = sand.u32 %s103, 1
        %s295 = scalar_lea.sflag [#allocation3], %s294
        %s296 = sand.u32 %s103, 1
        %s297 = smul.addr %s296, 16
        %s298 = scalar_lea.vmem [#allocation2], %s297
        // Predicated region
        $region29: #{tpu_custom_call.1} parent=27 // pred_check
          %p299 = pneg %p113
        $region30: #{tpu_custom_call.1} parent=27 // pred_check_branch
          %301 = sbr.rel (%p299) target = $region32
        $region31: #{tpu_custom_call.1} parent=27 // pred_region
          %s303 = ssub.s32 256, 256
          %304 = vsyncadd %s295, %s303
          %s305 = smul.addr %s21, 2
          %s306 = sadd.s32 %s23, %s305
          %s307 = smul.addr %s22, 4
          %s308 = sadd.s32 %s306, %s307
          %s309 = smul.addr %s308, 128
          %s310 = scalar_lea.hbm %s2, %s309
          %s311 = sshll.u32 %s298, 4
          %s312 = int_to_ptr.vmem [resolvable:$true] %s311
          %317 = dma.vmem_to_hbm [thread:$0]  %s312, 256, %s310, %s295, 128, 128, 8
        $region32: #{tpu_custom_call.1} parent=27 // pred_fallthru
          _
      $region28: #{tpu_custom_call.1} parent=5 // pred_fallthru
        _
      %p318 = scmp.le.s32.totalorder 2, %s11
      // Predicated region
      $region33: #{tpu_custom_call.1} parent=5 // pred_check
        %p319 = pneg %p318
      $region34: #{tpu_custom_call.1} parent=5 // pred_check_branch
        %321 = sbr.rel (%p319) target = $region36
      $region35: #{tpu_custom_call.1} parent=5 // pred_region
        %s322 = ssub.s32 %s11, 2
        // Predicated region
        $region37: #{tpu_custom_call.1} parent=35 // pred_check
          %p323 = pneg %p119
        $region38: #{tpu_custom_call.1} parent=35 // pred_check_branch
          %325 = sbr.rel (%p323) target = $region40
        $region39: #{tpu_custom_call.1} parent=35 // pred_region
          %s326 = sand.u32 %s104, 1
          %s327 = scalar_lea.sflag [#allocation3], %s326
          %s328 = sand.u32 %s104, 1
          %s329 = smul.addr %s328, 16
          %s330 = scalar_lea.vmem [#allocation2], %s329
          %331 = dma.done %s327, 256
        $region40: #{tpu_custom_call.1} parent=35 // pred_fallthru
          _
      $region36: #{tpu_custom_call.1} parent=5 // pred_fallthru
        _
    $region6: #{tpu_custom_call.1} parent=1 // loop_footer
      %s15 = sadd.s32 1, %s11
    $region7: #{tpu_custom_call.1} parent=1 // loop_footer_branch
      %10 = sbr.rel target = $region3
    $region8: #{tpu_custom_call.1} parent=1 // loop_exit
      _
    %332 = vsyncpa [#allocation3], 1
    %s333 = scalar_lea.sflag [#allocation3], 1
    %334 = vsyncpa %s333, 1

</llo_original>
